<compile_context>
chip_gen: v7x
topology: tpu7x:2x2x1
jax: 0.10.0
libtpu: 0.0.40
codegen_flags: <defaults>
</compile_context>

<pallas_src>
import jax
import jax.numpy as jnp
from jax.experimental import pallas as pl
from jax.experimental.pallas import tpu as pltpu


# ---------------------------------------------------------------------------
# Helpers
# ---------------------------------------------------------------------------

def _round_up(x, q):
    return ((x + q - 1) // q) * q


def _sublane_quantum(dtype):
    # 8 rows for 4-byte dtypes, 16 for 2-byte (bf16), 32 for 1-byte (int8).
    return max(8, 32 // jnp.dtype(dtype).itemsize)


def _vmem_budgets():
    """(pipeline working-set budget, scoped-VMEM limit) in bytes, per chip gen.

    v5e / v6e have 128 MiB of VMEM per core: large tiles amortize the
    ~0.35 us/step grid overhead (measured 29% -> 85% of HBM roofline as tiles
    grow).  v7x has only 64 MiB per TensorCore, so stay well under that.
    """
    try:
        cap = int(pltpu.get_tpu_info().vmem_capacity_bytes)
    except Exception:
        cap = 64 * 1024 * 1024            # conservative: assume v7x-sized VMEM
    if cap >= 100 * 1024 * 1024:          # v5e / v6e (128 MiB VMEM)
        return 48 * 1024 * 1024, 64 * 1024 * 1024
    return 24 * 1024 * 1024, 48 * 1024 * 1024   # v7x (64 MiB per TensorCore)


def _choose_batch_tile(n, cw, num_mod, itemsize, quantum, budget):
    """Largest sublane-quantum-aligned batch tile whose double-buffered
    working set (M input blocks + 1 fused output block, sublane/lane padding
    included) fits `budget`, while keeping >= 2 grid blocks when possible so a
    2-TensorCore chip (v7x) can shard the 'parallel' batch axis."""
    def step_bytes(tn):
        tn_pad = _round_up(tn, quantum)                         # sublane padding
        in_b = num_mod * tn_pad * _round_up(cw, 128) * itemsize
        out_b = tn_pad * _round_up(num_mod * cw, 128) * itemsize
        return 2 * (in_b + out_b)                               # double-buffered

    if n <= quantum:
        return n                            # single full-extent block (legal)
    tn = (n // quantum) * quantum
    while tn > quantum and step_bytes(tn) > budget:
        tn -= quantum
    # >= 2 blocks on the (parallel) batch axis: feeds both v7x TensorCores and
    # gives the pipeline something to overlap even on 1-TC chips.
    if n >= 2 * quantum:
        tn = min(tn, max(quantum, (pl.cdiv(n, 2) // quantum) * quantum))
    # TODO(synk): for extreme C*H*W where even a single-quantum batch tile
    # exceeds the budget, additionally split the lane axis (modality-innermost
    # grid) instead of relying on vmem_limit_bytes headroom.
    return tn


# ---------------------------------------------------------------------------
# Kernel 1: WeightedConcat fusion
# ---------------------------------------------------------------------------

def _make_weighted_concat_kernel(num_mod, cw, scale_in_f32):
    def kernel(w_ref, *refs):
        # w_ref      : SMEM (M,) f32 softmaxed weights.
        # refs[:M]   : M input tiles, each (tn, C*H*W) in VMEM.
        # refs[M]    : output tile (tn, M*C*H*W) -- the channel concat is fused
        #              here: modality m lands at lane offset m*C*H*W, which is
        #              128-aligned whenever C*H*W is, so every store is a
        #              full, unmasked lane-dense write (no read-modify-write).
        o_ref = refs[num_mod]
        for m in range(num_mod):
            x = refs[m][...]
            if scale_in_f32:
                val = (x.astype(jnp.float32) * w_ref[m]).astype(o_ref.dtype)
            else:
                # Native-dtype scale (free on v6e/v7x bf16 VALUs; exact for f32).
                val = (x * w_ref[m].astype(x.dtype)).astype(o_ref.dtype)
            o_ref[:, m * cw:(m + 1) * cw] = val
    return kernel


def weighted_concat(xs, raw_weight):
    """xs: list of (N, C, *spatial) arrays, one per character of `mode`.
    raw_weight: (M,) unnormalized parameter (softmaxed here, like the module).
    Returns cat([xs[i] * softmax(raw_weight)[i]], axis=1)."""
    num_mod = len(xs)
    n = xs[0].shape[0]
    c = xs[0].shape[1]
    spatial = tuple(xs[0].shape[2:])
    cw = 1
    for d in xs[0].shape[1:]:
        cw *= d
    dtype = xs[0].dtype
    itemsize = jnp.dtype(dtype).itemsize

    # Tiny length-M softmax in f32 (numerics parity with the f32 parameter).
    w_soft = jax.nn.softmax(raw_weight.astype(jnp.float32))

    # Contiguity-preserving flatten of (C, *spatial) into the lane axis.
    xs2d = [x.reshape(n, cw) for x in xs]

    quantum = _sublane_quantum(dtype)
    budget, vmem_limit = _vmem_budgets()
    tn = _choose_batch_tile(n, cw, num_mod, itemsize, quantum, budget)
    nb = pl.cdiv(n, tn)                      # cdiv grid: last block edge-masked

    # On v5e (no bf16 VALU) flip this to True for sub-32-bit inputs.
    scale_in_f32 = False

    w_spec = pl.BlockSpec(memory_space=pltpu.MemorySpace.SMEM)
    in_spec = pl.BlockSpec((tn, cw), lambda i: (i, 0))
    out_spec = pl.BlockSpec((tn, num_mod * cw), lambda i: (i, 0))
    # (If real shapes ever force tiny tiles, add pipeline_mode=pl.Buffered(3)
    #  to the input specs; bigger tiles -- chosen above -- are the primary fix.)

    out2d = pl.pallas_call(
        _make_weighted_concat_kernel(num_mod, cw, scale_in_f32),
        out_shape=jax.ShapeDtypeStruct((n, num_mod * cw), dtype),
        grid=(nb,),
        in_specs=[w_spec] + [in_spec] * num_mod,
        out_specs=out_spec,
        compiler_params=pltpu.CompilerParams(
            dimension_semantics=("parallel",),
            vmem_limit_bytes=vmem_limit,
        ),
    )(w_soft, *xs2d)

    # Contiguity-preserving reshape back to the concat layout (no HBM traffic).
    return out2d.reshape((n, num_mod * c) + spatial)


# ---------------------------------------------------------------------------
# Kernel 2: full FusionModule.forward -- weighted concat fused into the clf MLP
# ---------------------------------------------------------------------------

def _make_fused_clf_kernel(num_mod, c, negative_slope=0.01):
    def kernel(*refs):
        # refs: x_0..x_{M-1} (N, C), w1t (M*C, H), b1 (1, H), w2t (H, K),
        #       b2 (1, K), out (N, K).  softmax weights are pre-folded into w1t.
        xs = refs[:num_mod]
        w1t_ref, b1_ref, w2t_ref, b2_ref, o_ref = refs[num_mod:]
        w1t = w1t_ref[...]
        # First Linear, accumulated per modality: the concat is implicit,
        # never materialized.
        acc = jnp.dot(xs[0][...], w1t[:c, :], preferred_element_type=jnp.float32)
        for m in range(1, num_mod):
            acc = acc + jnp.dot(xs[m][...], w1t[m * c:(m + 1) * c, :],
                                preferred_element_type=jnp.float32)
        acc = acc + b1_ref[...]
        # LeakyReLU (PyTorch default negative_slope = 0.01).
        acc = jnp.where(acc >= 0, acc, negative_slope * acc)
        out = jnp.dot(acc.astype(w2t_ref.dtype), w2t_ref[...],
                      preferred_element_type=jnp.float32) + b2_ref[...]
        o_ref[...] = out.astype(o_ref.dtype)
    return kernel


def fusion_module_forward(xs, raw_weight, w1, b1, w2, b2):
    """FusionModule.forward for fusion_way='weighted_concat', clf_way='mlp'.

    xs: M per-modality features, each (N, in_channel // M).
    w1/b1: clf first Linear (hidden=32, in_channel) / (hidden,)
    w2/b2: clf second Linear (num_class, hidden) / (num_class,)

    softmax(weight) is folded into w1's columns:
        feature @ W1.T == sum_m x_m @ (softmax(w)[m] * W1[:, m*C:(m+1)*C]).T
    so the fused feature is never written to / re-read from HBM.
    """
    num_mod = len(xs)
    n, c = xs[0].shape
    hidden = w1.shape[0]
    num_class = w2.shape[0]
    dtype = xs[0].dtype

    w_soft = jax.nn.softmax(raw_weight.astype(jnp.float32))
    w1_folded = w1.astype(jnp.float32) * jnp.repeat(w_soft, c)[None, :]
    w1t = w1_folded.T.astype(dtype)                    # (M*C, hidden)
    w2t = w2.T.astype(dtype)                           # (hidden, num_class)
    b1r = b1.reshape(1, hidden).astype(jnp.float32)
    b2r = b2.reshape(1, num_class).astype(jnp.float32)

    # Small shapes: single block, everything resident in VMEM.
    # TODO(synk): for large batch N, tile the batch axis with a 1-D grid
    # (weights stay block-resident across steps via a constant index map).
    return pl.pallas_call(
        _make_fused_clf_kernel(num_mod, c),
        out_shape=jax.ShapeDtypeStruct((n, num_class), dtype),
    )(*xs, w1t, b1r, w2t, b2r)


# ---------------------------------------------------------------------------
# Demo / correctness check
# ---------------------------------------------------------------------------

if __name__ == "__main__":
    mode = "rgb"                               # 3 modalities, like FusionModule("rgb", ...)
    M = len(mode)
    key = jax.random.PRNGKey(0)
    keys = jax.random.split(key, 2 * M + 4)

    # Fusion parameter (PyTorch init is zeros -> uniform softmax; distinct
    # values here so the per-modality scaling is actually exercised).
    raw_weight = jnp.array([0.3, -0.7, 0.2], dtype=jnp.float32)
    w_soft = jax.nn.softmax(raw_weight)

    # ---- Demo 1: WeightedConcat fusion on conv-style (N, C, H, W) features --
    N, C, H, W = 2, 4, 16, 16
    x = {m: jax.random.normal(keys[i], (N, C, H, W), dtype=jnp.float32)
         for i, m in enumerate(mode)}
    xs = [x[m] for m in mode]

    fused = jax.block_until_ready(weighted_concat(xs, raw_weight))
    fused_ref = jnp.concatenate(
        [x[m] * w_soft[i] for i, m in enumerate(mode)], axis=1)
    assert fused.shape == (N, M * C, H, W), fused.shape
    assert jnp.allclose(fused, fused_ref, atol=1e-6, rtol=1e-6), \
        float(jnp.max(jnp.abs(fused - fused_ref)))

    # ---- Demo 2: full FusionModule.forward (fusion + MLP clf) ---------------
    Cf, HIDDEN, NUM_CLASS = 32, 32, 10          # in_channel = M * Cf = 96
    Nf = 2
    feats = [jax.random.normal(keys[M + i], (Nf, Cf), dtype=jnp.float32)
             for i in range(M)]
    w1 = 0.1 * jax.random.normal(keys[2 * M + 0], (HIDDEN, M * Cf), dtype=jnp.float32)
    b1 = 0.1 * jax.random.normal(keys[2 * M + 1], (HIDDEN,), dtype=jnp.float32)
    w2 = 0.1 * jax.random.normal(keys[2 * M + 2], (NUM_CLASS, HIDDEN), dtype=jnp.float32)
    b2 = 0.1 * jax.random.normal(keys[2 * M + 3], (NUM_CLASS,), dtype=jnp.float32)

    logits = jax.block_until_ready(
        fusion_module_forward(feats, raw_weight, w1, b1, w2, b2))

    feat_ref = jnp.concatenate([feats[i] * w_soft[i] for i in range(M)], axis=1)
    h_ref = jnp.dot(feat_ref, w1.T, precision=jax.lax.Precision.HIGHEST) + b1
    h_ref = jnp.where(h_ref >= 0, h_ref, 0.01 * h_ref)
    logits_ref = jnp.dot(h_ref, w2.T, precision=jax.lax.Precision.HIGHEST) + b2
    assert logits.shape == (Nf, NUM_CLASS), logits.shape
    assert jnp.allclose(logits, logits_ref, atol=1e-2, rtol=1e-2), \
        float(jnp.max(jnp.abs(logits - logits_ref)))

    print("KERNEL_OK")
</pallas_src>

<mosaic_0001>
module attributes {stable_mosaic.version = 11 : i64} {
  func.func @kernel(%arg0: i32, %arg1: memref<3xf32, #tpu.memory_space<smem>>, %arg2: memref<2x1024xf32, #tpu.memory_space<vmem>>, %arg3: memref<2x1024xf32, #tpu.memory_space<vmem>>, %arg4: memref<2x1024xf32, #tpu.memory_space<vmem>>, %arg5: memref<2x3072xf32, #tpu.memory_space<vmem>>) attributes {dimension_semantics = [#tpu.dimension_semantics<parallel>], iteration_bounds = array<i64: 1>, scalar_prefetch = 0 : i64, scratch_operands = 0 : i64, tpu.core_type = #tpu.core_type<tc>, window_params = [{transform_indices = @transform_0, window_bounds = array<i64: 3>}, {transform_indices = @transform_1, window_bounds = array<i64: 2, 1024>}, {transform_indices = @transform_2, window_bounds = array<i64: 2, 1024>}, {transform_indices = @transform_3, window_bounds = array<i64: 2, 1024>}, {transform_indices = @transform_4, window_bounds = array<i64: 2, 3072>}]} {
    %c0 = arith.constant 0 : index
    %c0_0 = arith.constant 0 : index
    %0 = vector.load %arg2[%c0, %c0_0] : memref<2x1024xf32, #tpu.memory_space<vmem>>, vector<2x1024xf32>
    %c0_1 = arith.constant 0 : index
    %1 = memref.load %arg1[%c0_1] : memref<3xf32, #tpu.memory_space<smem>>
    %2 = vector.broadcast %1 : f32 to vector<2x1024xf32>
    %3 = arith.mulf %0, %2 : vector<2x1024xf32>
    %c0_2 = arith.constant 0 : index
    %c0_3 = arith.constant 0 : index
    %4 = vector.load %arg5[%c0_2, %c0_3] : memref<2x3072xf32, #tpu.memory_space<vmem>>, vector<2x1024xf32>
    tpu.vector_store %arg5[%c0_2, %c0_3], %3 {strides = array<i32>} : memref<2x3072xf32, #tpu.memory_space<vmem>>, vector<2x1024xf32>,
    %c0_4 = arith.constant 0 : index
    %c0_5 = arith.constant 0 : index
    %5 = vector.load %arg3[%c0_4, %c0_5] : memref<2x1024xf32, #tpu.memory_space<vmem>>, vector<2x1024xf32>
    %c1 = arith.constant 1 : index
    %6 = memref.load %arg1[%c1] : memref<3xf32, #tpu.memory_space<smem>>
    %7 = vector.broadcast %6 : f32 to vector<2x1024xf32>
    %8 = arith.mulf %5, %7 : vector<2x1024xf32>
    %c0_6 = arith.constant 0 : index
    %c1024 = arith.constant 1024 : index
    %9 = vector.load %arg5[%c0_6, %c1024] : memref<2x3072xf32, #tpu.memory_space<vmem>>, vector<2x1024xf32>
    tpu.vector_store %arg5[%c0_6, %c1024], %8 {strides = array<i32>} : memref<2x3072xf32, #tpu.memory_space<vmem>>, vector<2x1024xf32>,
    %c0_7 = arith.constant 0 : index
    %c0_8 = arith.constant 0 : index
    %10 = vector.load %arg4[%c0_7, %c0_8] : memref<2x1024xf32, #tpu.memory_space<vmem>>, vector<2x1024xf32>
    %c2 = arith.constant 2 : index
    %11 = memref.load %arg1[%c2] : memref<3xf32, #tpu.memory_space<smem>>
    %12 = vector.broadcast %11 : f32 to vector<2x1024xf32>
    %13 = arith.mulf %10, %12 : vector<2x1024xf32>
    %c0_9 = arith.constant 0 : index
    %c2048 = arith.constant 2048 : index
    %14 = vector.load %arg5[%c0_9, %c2048] : memref<2x3072xf32, #tpu.memory_space<vmem>>, vector<2x1024xf32>
    tpu.vector_store %arg5[%c0_9, %c2048], %13 {strides = array<i32>} : memref<2x3072xf32, #tpu.memory_space<vmem>>, vector<2x1024xf32>,
    return
  }
  func.func @transform_0(%arg0: i32) -> i32 {
    %c0_i32 = arith.constant 0 : i32
    %c0_i32_0 = arith.constant 0 : i32
    return %c0_i32 : i32
  }
  func.func @transform_1(%arg0: i32) -> (i32, i32) {
    %c0_i32 = arith.constant 0 : i32
    %c0_i32_0 = arith.constant 0 : i32
    return %arg0, %c0_i32 : i32, i32
  }
  func.func @transform_2(%arg0: i32) -> (i32, i32) {
    %c0_i32 = arith.constant 0 : i32
    %c0_i32_0 = arith.constant 0 : i32
    return %arg0, %c0_i32 : i32, i32
  }
  func.func @transform_3(%arg0: i32) -> (i32, i32) {
    %c0_i32 = arith.constant 0 : i32
    %c0_i32_0 = arith.constant 0 : i32
    return %arg0, %c0_i32 : i32, i32
  }
  func.func @transform_4(%arg0: i32) -> (i32, i32) {
    %c0_i32 = arith.constant 0 : i32
    %c0_i32_0 = arith.constant 0 : i32
    return %arg0, %c0_i32 : i32, i32
  }
}

</mosaic_0001>

<llo_original>
// kernel: tpu_custom_call.1
$region0: #{tpu_custom_call.1}
  #allocation0 [shape = 'u32[]', space=smem, size = 0x4, offset = 0x4, fixed_abs, tag = 'smem constant byte address 0x4 - core index']
  #allocation1 [shape = 'u32[144,128]{1,0:T(1,128)}', space=vmem, size = 0x12000, scoped, tag = 'internal scratch']
  %s0 = inlined_call_operand.hbm [shape: f32[3], index: 0, kind: input, shape index: {}]
  %s1 = inlined_call_operand.hbm [shape: f32[2,1024], index: 1, kind: input, shape index: {}]
  %s2 = inlined_call_operand.hbm [shape: f32[2,1024], index: 2, kind: input, shape index: {}]
  %s3 = inlined_call_operand.hbm [shape: f32[2,1024], index: 3, kind: input, shape index: {}]
  %s4 = inlined_call_operand.hbm [shape: f32[2,3072], index: 4, kind: output, shape index: {}]
  %s5 = sld [smem:[#allocation0]]
  $region42: #{tpu_custom_call.1} parent=0
    _
  %s7 = ssub.s32 1, %s5
  %s8 = scalar_select 0, %s7, %s5
  $region1: #{tpu_custom_call.1} parent=0
    #allocation2 [shape = 'u8[512]{0}', space=smem, size = 0x200, scoped, tag = 'input window, operand 0, single buffered']
    #allocation3 [shape = 's32[1]{0}', space=sflag, size = 0x4, scoped, tag = 'scoped memory for tpu_custom_call.1']
    #allocation4 [shape = 's32[1]{0}', space=sflag, size = 0x4, scoped, tag = 'scoped memory for tpu_custom_call.1']
    #allocation5 [shape = 's32[1]{0}', space=sflag, size = 0x4, scoped, tag = 'scoped memory for tpu_custom_call.1']
    #allocation6 [shape = 'u8[8192]{0}', space=vmem, size = 0x2000, scoped, tag = 'input window, operand 1, single buffered']
    #allocation7 [shape = 'u8[8192]{0}', space=vmem, size = 0x2000, scoped, tag = 'input window, operand 2, single buffered']
    #allocation8 [shape = 's32[1]{0}', space=sflag, size = 0x4, scoped, tag = 'scoped memory for tpu_custom_call.1']
    #allocation9 [shape = 'u8[8192]{0}', space=vmem, size = 0x2000, scoped, tag = 'input window, operand 3, single buffered']
    #allocation10 [shape = 'u8[24576]{0}', space=vmem, size = 0x6000, scoped, tag = 'output window, operand 0, single buffered']
    %9 = vsyncpa [#allocation5], 0
    %10 = vsyncpa [#allocation3], 0
    %11 = vsyncpa [#allocation8], 0
    %12 = vsyncpa [#allocation4], 0
    // Predicated region
    $region2: #{tpu_custom_call.1} parent=1 // pred_check
      _
    $region3: #{tpu_custom_call.1} parent=1 // pred_check_branch
      %14 = sbr.rel (0) target = $region5
    $region4: #{tpu_custom_call.1} parent=1 // pred_region
      %s16 = ssub.s32 16, 16
      %17 = vsyncadd [#allocation5], %s16
      %20 = dma.hbm_to_smem %s0, 16, [#allocation2], [#allocation5]
    $region5: #{tpu_custom_call.1} parent=1 // pred_fallthru
      _
    // Predicated region
    $region6: #{tpu_custom_call.1} parent=1 // pred_check
      _
    $region7: #{tpu_custom_call.1} parent=1 // pred_check_branch
      %22 = sbr.rel (0) target = $region9
    $region8: #{tpu_custom_call.1} parent=1 // pred_region
      %s24 = ssub.s32 256, 256
      %25 = vsyncadd [#allocation3], %s24
      %s27 = sshll.u32 [#allocation6], 4
      %s28 = int_to_ptr.vmem [resolvable:$true] %s27
      %30 = dma.hbm_to_vmem [thread:$0]  %s1, 256, %s28, [#allocation3]
    $region9: #{tpu_custom_call.1} parent=1 // pred_fallthru
      _
    // Predicated region
    $region10: #{tpu_custom_call.1} parent=1 // pred_check
      _
    $region11: #{tpu_custom_call.1} parent=1 // pred_check_branch
      %32 = sbr.rel (0) target = $region13
    $region12: #{tpu_custom_call.1} parent=1 // pred_region
      %s34 = ssub.s32 256, 256
      %35 = vsyncadd [#allocation8], %s34
      %s37 = sshll.u32 [#allocation7], 4
      %s38 = int_to_ptr.vmem [resolvable:$true] %s37
      %40 = dma.hbm_to_vmem [thread:$0]  %s2, 256, %s38, [#allocation8]
    $region13: #{tpu_custom_call.1} parent=1 // pred_fallthru
      _
    // Predicated region
    $region14: #{tpu_custom_call.1} parent=1 // pred_check
      _
    $region15: #{tpu_custom_call.1} parent=1 // pred_check_branch
      %42 = sbr.rel (0) target = $region17
    $region16: #{tpu_custom_call.1} parent=1 // pred_region
      %s44 = ssub.s32 256, 256
      %45 = vsyncadd [#allocation8], %s44
      %s47 = sshll.u32 [#allocation9], 4
      %s48 = int_to_ptr.vmem [resolvable:$true] %s47
      %50 = dma.hbm_to_vmem [thread:$0]  %s3, 256, %s48, [#allocation8]
    $region17: #{tpu_custom_call.1} parent=1 // pred_fallthru
      _
    // Predicated region
    $region18: #{tpu_custom_call.1} parent=1 // pred_check
      _
    $region19: #{tpu_custom_call.1} parent=1 // pred_check_branch
      %52 = sbr.rel (0) target = $region21
    $region20: #{tpu_custom_call.1} parent=1 // pred_region
      %53 = dma.done [#allocation5], 16
    $region21: #{tpu_custom_call.1} parent=1 // pred_fallthru
      _
    // Predicated region
    $region22: #{tpu_custom_call.1} parent=1 // pred_check
      _
    $region23: #{tpu_custom_call.1} parent=1 // pred_check_branch
      %55 = sbr.rel (0) target = $region25
    $region24: #{tpu_custom_call.1} parent=1 // pred_region
      %56 = dma.done [#allocation3], 256
    $region25: #{tpu_custom_call.1} parent=1 // pred_fallthru
      _
    // Predicated region
    $region26: #{tpu_custom_call.1} parent=1 // pred_check
      _
    $region27: #{tpu_custom_call.1} parent=1 // pred_check_branch
      %58 = sbr.rel (0) target = $region29
    $region28: #{tpu_custom_call.1} parent=1 // pred_region
      %59 = dma.done [#allocation8], 256
    $region29: #{tpu_custom_call.1} parent=1 // pred_fallthru
      _
    // Predicated region
    $region30: #{tpu_custom_call.1} parent=1 // pred_check
      _
    $region31: #{tpu_custom_call.1} parent=1 // pred_check_branch
      %61 = sbr.rel (0) target = $region33
    $region32: #{tpu_custom_call.1} parent=1 // pred_region
      %62 = dma.done [#allocation8], 256
    $region33: #{tpu_custom_call.1} parent=1 // pred_fallthru
      _
    %63 = sfence
    %v64 = vld [vmem:[#allocation6] sm:$0xff]
    %v65 = vld [vmem:[#allocation6 + $0x8] sm:$0xff]
    %s66 = sld [smem:[#allocation2]]
    %v67 = vstv %s66
    %v68 = vmul.f32 %v64, %v67
    %v69 = vmul.f32 %v65, %v67
    %70 = vst [vmem:[#allocation10] sm:$0xff] %v68
    %71 = vst [vmem:[#allocation10 + $0x8] sm:$0xff] %v69
    %v72 = vld [vmem:[#allocation7] sm:$0xff]
    %v73 = vld [vmem:[#allocation7 + $0x8] sm:$0xff]
    %s74 = sld [smem:[#allocation2 + $0x1]]
    %v75 = vstv %s74
    %v76 = vmul.f32 %v72, %v75
    %v77 = vmul.f32 %v73, %v75
    %78 = vst [vmem:[#allocation10 + $0x10] sm:$0xff] %v76
    %79 = vst [vmem:[#allocation10 + $0x18] sm:$0xff] %v77
    %v80 = vld [vmem:[#allocation9] sm:$0xff]
    %v81 = vld [vmem:[#allocation9 + $0x8] sm:$0xff]
    %s82 = sld [smem:[#allocation2 + $0x2]]
    %v83 = vstv %s82
    %v84 = vmul.f32 %v80, %v83
    %v85 = vmul.f32 %v81, %v83
    %86 = vst [vmem:[#allocation10 + $0x20] sm:$0xff] %v84
    %87 = vst [vmem:[#allocation10 + $0x28] sm:$0xff] %v85
    // Predicated region
    $region34: #{tpu_custom_call.1} parent=1 // pred_check
      _
    $region35: #{tpu_custom_call.1} parent=1 // pred_check_branch
      %89 = sbr.rel (0) target = $region37
    $region36: #{tpu_custom_call.1} parent=1 // pred_region
      %s91 = ssub.s32 768, 768
      %92 = vsyncadd [#allocation4], %s91
      %s94 = sshll.u32 [#allocation10], 4
      %s95 = int_to_ptr.vmem [resolvable:$true] %s94
      %97 = dma.vmem_to_hbm [thread:$0]  %s95, 768, %s4, [#allocation4]
    $region37: #{tpu_custom_call.1} parent=1 // pred_fallthru
      _
    // Predicated region
    $region38: #{tpu_custom_call.1} parent=1 // pred_check
      _
    $region39: #{tpu_custom_call.1} parent=1 // pred_check_branch
      %99 = sbr.rel (0) target = $region41
    $region40: #{tpu_custom_call.1} parent=1 // pred_region
      %100 = dma.done [#allocation4], 768
    $region41: #{tpu_custom_call.1} parent=1 // pred_fallthru
      _
    %101 = vsyncpa [#allocation3], 1
    %102 = vsyncpa [#allocation8], 1
    %103 = vsyncpa [#allocation4], 1
    %104 = vsyncpa [#allocation5], 1

</llo_original>
